<compile_context>
chip_gen: v6e
topology: v6e:2x2x1
jax: 0.10.0
libtpu: 0.0.40
codegen_flags: <defaults>
</compile_context>

<pallas_src>
import jax
import jax.numpy as jnp
from jax import lax
from jax.experimental import pallas as pl
from jax.experimental.pallas import tpu as pltpu

_LANES = 128


def _multi_ce_kernel(tgt_ref, *rest):
    """One grid step: per-pixel cross entropy summed over all prediction heads.

    tgt_ref : (1, rows_tile, 128) int32 target class ids (-1 marks padding pixels)
    rest    : num_heads logit refs, each (1, C, rows_tile, 128)
              + output ref (1, rows_tile, 128) f32
    """
    logit_refs, out_ref = rest[:-1], rest[-1]

    tgt = tgt_ref[0]                                   # (rows_tile, 128) int32
    num_classes = logit_refs[0].shape[1]

    # Target selection mask & pad-validity mask: built once, reused for all heads.
    class_iota = lax.broadcasted_iota(jnp.int32, (num_classes,) + tgt.shape, 0)
    onehot = class_iota == tgt[None]                   # (C, rows_tile, 128) bool
    valid = (tgt >= 0) & (tgt < num_classes)           # padded pixels contribute 0

    acc = jnp.zeros(tgt.shape, jnp.float32)            # per-pixel loss summed over heads

    for lref in logit_refs:
        x = lref[0]                                    # (C, rows_tile, 128), native dtype
        # Vectorized over the class axis: max / exp / sum on dense (C, rows, 128) tiles.
        m = jnp.max(x, axis=0, keepdims=True)
        z = x.astype(jnp.float32) - m.astype(jnp.float32)
        sum_exp = jnp.sum(jnp.exp(z), axis=0)          # (rows_tile, 128)
        tgt_z = jnp.sum(jnp.where(onehot, z, 0.0), axis=0)
        # CE per pixel = logsumexp(x) - x[tgt] = log(sum_exp) - (x[tgt] - m)
        acc = acc + (jnp.log(sum_exp) - tgt_z)

    out_ref[0] = jnp.where(valid, acc, 0.0)


def _vmem_limit_bytes():
    """Generation-aware VMEM budget: size off the queried capacity, with headroom."""
    cap = None
    try:
        info = pltpu.get_tpu_info()
        cap = getattr(info, "vmem_capacity_bytes", None)
    except Exception:
        cap = None
    if not cap:
        cap = 64 << 20  # conservative default (v7x per-TensorCore size)
    return int(min((cap * 3) // 4, 96 << 20))


def _pick_rows_tile(rows, num_classes, itemsize, num_heads, budget_bytes):
    """Rows (of 128 pixels) per block + padded row count.

    Footprint per row of 128 pixels:
      - double-buffered logit tiles for every head
      - double-buffered tgt (int32) and out (f32) tiles
      - headroom for the in-kernel f32 temporaries (z / exp)
    """
    per_row = num_heads * 2 * num_classes * _LANES * itemsize
    per_row += 2 * 2 * _LANES * 4
    per_row += 2 * num_classes * _LANES * 4
    cap_rows = max(8, budget_bytes // max(per_row, 1))

    if rows <= cap_rows:
        # Full-extent block along the row axis: always layout-legal, single row-block.
        return rows, rows

    rows_tile = max(8, (cap_rows // 8) * 8)            # sublane-aligned tile
    rows_pad = ((rows + rows_tile - 1) // rows_tile) * rows_tile
    return rows_tile, rows_pad


def multi_ce_loss(preds, targets):
    """preds: tuple of 7 arrays (N, C, H, W) float; targets: (N, H, W) int.

    Returns dict(loss=sum_i mean-CE(preds[i], targets)), matching Multi_CELoss(use_ohem=False).
    All heads must share (N, C, H, W).
    """
    preds = tuple(preds)
    num_heads = len(preds)
    N, C, H, W = preds[0].shape
    HW = H * W
    P = N * HW

    rows = pl.cdiv(HW, _LANES)
    hw_pad128 = rows * _LANES

    vmem_limit = _vmem_limit_bytes()
    # Use ~2/3 of the limit for pipelined buffers + temporaries.
    rows_tile, rows_pad = _pick_rows_tile(
        rows, C, jnp.dtype(preds[0].dtype).itemsize, num_heads,
        budget_bytes=(vmem_limit * 2) // 3)
    hw_pad = rows_pad * _LANES

    # NCHW-native: contiguous reshapes; padding (only if HW % (rows_tile*128) != 0)
    # uses target = -1 so padded pixels are masked to contribute 0 in-kernel.
    logits = []
    for p in preds:
        x = jnp.reshape(p, (N, C, HW))
        if hw_pad != HW:
            x = jnp.pad(x, ((0, 0), (0, 0), (0, hw_pad - HW)))
        logits.append(jnp.reshape(x, (N, C, rows_pad, _LANES)))

    t = jnp.reshape(targets, (N, HW)).astype(jnp.int32)
    if hw_pad != HW:
        t = jnp.pad(t, ((0, 0), (0, hw_pad - HW)), constant_values=-1)
    tgt = jnp.reshape(t, (N, rows_pad, _LANES))

    grid = (N, rows_pad // rows_tile)

    logit_spec = pl.BlockSpec((1, C, rows_tile, _LANES), lambda i, j: (i, 0, j, 0))
    tgt_spec = pl.BlockSpec((1, rows_tile, _LANES), lambda i, j: (i, j, 0))
    out_spec = pl.BlockSpec((1, rows_tile, _LANES), lambda i, j: (i, j, 0))

    loss_map = pl.pallas_call(
        _multi_ce_kernel,
        out_shape=jax.ShapeDtypeStruct((N, rows_pad, _LANES), jnp.float32),
        grid_spec=pltpu.PrefetchScalarGridSpec(
            num_scalar_prefetch=0,
            grid=grid,
            in_specs=[tgt_spec] + [logit_spec] * num_heads,
            out_specs=out_spec,
        ),
        compiler_params=pltpu.CompilerParams(
            # Both grid axes are independent (per-block output, no shared accumulator),
            # so both TensorCores of a megacore can take grid steps.
            dimension_semantics=("parallel", "parallel"),
            vmem_limit_bytes=vmem_limit,
        ),
    )(tgt, *logits)

    del hw_pad128  # (informational only)
    # sum of the 7 per-head means == (per-pixel sum over heads) / (N*H*W); padded
    # pixels were forced to 0 in the kernel so the padded sum is exact.
    loss = jnp.sum(loss_map) / jnp.float32(P)
    return {"loss": loss}


def _reference_loss(preds, targets):
    """Plain-JAX reference matching nn.CrossEntropyLoss (mean) summed over the 7 heads."""
    total = jnp.float32(0.0)
    t = targets.reshape(-1)
    for p in preds:
        c = p.shape[1]
        logits = jnp.transpose(p, (0, 2, 3, 1)).reshape(-1, c).astype(jnp.float32)
        lse = jax.nn.logsumexp(logits, axis=-1)
        tl = jnp.take_along_axis(logits, t[:, None], axis=-1)[:, 0]
        total = total + jnp.mean(lse - tl)
    return total


if __name__ == "__main__":
    key = jax.random.PRNGKey(0)
    N, C, H, W = 2, 4, 16, 16
    keys = jax.random.split(key, 8)
    preds = tuple(jax.random.normal(keys[i], (N, C, H, W), dtype=jnp.float32)
                  for i in range(7))
    targets = jax.random.randint(keys[7], (N, H, W), 0, C, dtype=jnp.int32)

    out = multi_ce_loss(preds, targets)
    loss = jax.block_until_ready(out["loss"])

    ref = _reference_loss(preds, targets)
    assert jnp.allclose(loss, ref, rtol=1e-5, atol=1e-5), (loss, ref)

    print("KERNEL_OK")
</pallas_src>

<mosaic_0001>
module attributes {stable_mosaic.version = 11 : i64} {
  func.func @_multi_ce_kernel(%arg0: i32, %arg1: i32, %arg2: memref<1x2x128xi32, #tpu.memory_space<vmem>>, %arg3: memref<1x4x2x128xf32, #tpu.memory_space<vmem>>, %arg4: memref<1x4x2x128xf32, #tpu.memory_space<vmem>>, %arg5: memref<1x4x2x128xf32, #tpu.memory_space<vmem>>, %arg6: memref<1x4x2x128xf32, #tpu.memory_space<vmem>>, %arg7: memref<1x4x2x128xf32, #tpu.memory_space<vmem>>, %arg8: memref<1x4x2x128xf32, #tpu.memory_space<vmem>>, %arg9: memref<1x4x2x128xf32, #tpu.memory_space<vmem>>, %arg10: memref<1x2x128xf32, #tpu.memory_space<vmem>>) attributes {dimension_semantics = [#tpu.dimension_semantics<parallel>, #tpu.dimension_semantics<parallel>], iteration_bounds = array<i64: 2, 1>, scalar_prefetch = 0 : i64, scratch_operands = 0 : i64, tpu.core_type = #tpu.core_type<tc>, window_params = [{transform_indices = @transform_0, window_bounds = array<i64: 1, 2, 128>}, {transform_indices = @transform_1, window_bounds = array<i64: 1, 4, 2, 128>}, {transform_indices = @transform_2, window_bounds = array<i64: 1, 4, 2, 128>}, {transform_indices = @transform_3, window_bounds = array<i64: 1, 4, 2, 128>}, {transform_indices = @transform_4, window_bounds = array<i64: 1, 4, 2, 128>}, {transform_indices = @transform_5, window_bounds = array<i64: 1, 4, 2, 128>}, {transform_indices = @transform_6, window_bounds = array<i64: 1, 4, 2, 128>}, {transform_indices = @transform_7, window_bounds = array<i64: 1, 4, 2, 128>}, {transform_indices = @transform_8, window_bounds = array<i64: 1, 2, 128>}]} {
    %c0 = arith.constant 0 : index
    %c0_0 = arith.constant 0 : index
    %c0_1 = arith.constant 0 : index
    %0 = vector.load %arg2[%c0, %c0_0, %c0_1] : memref<1x2x128xi32, #tpu.memory_space<vmem>>, vector<1x2x128xi32>
    %1 = vector.shape_cast %0 : vector<1x2x128xi32> to vector<2x128xi32>
    %2 = tpu.iota {dimensions = array<i32: 0>} : vector<4x2x128xi32>
    %3 = vector.shape_cast %1 : vector<2x128xi32> to vector<1x2x128xi32>
    %4 = vector.broadcast %3 : vector<1x2x128xi32> to vector<4x2x128xi32>
    %5 = arith.cmpi eq, %2, %4 : vector<4x2x128xi32>
    %c0_i32 = arith.constant 0 : i32
    %6 = vector.broadcast %c0_i32 : i32 to vector<2x128xi32>
    %7 = arith.cmpi sge, %1, %6 : vector<2x128xi32>
    %c4_i32 = arith.constant 4 : i32
    %8 = vector.broadcast %c4_i32 : i32 to vector<2x128xi32>
    %9 = arith.cmpi slt, %1, %8 : vector<2x128xi32>
    %10 = arith.andi %7, %9 : vector<2x128xi1>
    %cst = arith.constant 0.000000e+00 : f32
    %11 = vector.broadcast %cst : f32 to vector<2x128xf32>
    %c0_2 = arith.constant 0 : index
    %c0_3 = arith.constant 0 : index
    %c0_4 = arith.constant 0 : index
    %c0_5 = arith.constant 0 : index
    %12 = vector.load %arg3[%c0_2, %c0_3, %c0_4, %c0_5] : memref<1x4x2x128xf32, #tpu.memory_space<vmem>>, vector<1x4x2x128xf32>
    %13 = vector.shape_cast %12 : vector<1x4x2x128xf32> to vector<4x2x128xf32>
    %cst_6 = arith.constant dense<0xFF800000> : vector<2x128xf32>
    %14 = vector.multi_reduction <maximumf>, %13, %cst_6 [0] : vector<4x2x128xf32> to vector<2x128xf32>
    %15 = vector.shape_cast %14 : vector<2x128xf32> to vector<1x2x128xf32>
    %16 = vector.broadcast %15 : vector<1x2x128xf32> to vector<4x2x128xf32>
    %17 = arith.subf %13, %16 : vector<4x2x128xf32>
    %18 = math.exp %17 : vector<4x2x128xf32>
    %cst_7 = arith.constant dense<0.000000e+00> : vector<2x128xf32>
    %19 = vector.multi_reduction <add>, %18, %cst_7 [0] : vector<4x2x128xf32> to vector<2x128xf32>
    %cst_8 = arith.constant 0.000000e+00 : f32
    %20 = vector.broadcast %cst_8 : f32 to vector<4x2x128xf32>
    %21 = arith.select %5, %17, %20 : vector<4x2x128xi1>, vector<4x2x128xf32>
    %cst_9 = arith.constant dense<0.000000e+00> : vector<2x128xf32>
    %22 = vector.multi_reduction <add>, %21, %cst_9 [0] : vector<4x2x128xf32> to vector<2x128xf32>
    %23 = math.log %19 : vector<2x128xf32>
    %24 = arith.subf %23, %22 : vector<2x128xf32>
    %25 = arith.addf %11, %24 : vector<2x128xf32>
    %c0_10 = arith.constant 0 : index
    %c0_11 = arith.constant 0 : index
    %c0_12 = arith.constant 0 : index
    %c0_13 = arith.constant 0 : index
    %26 = vector.load %arg4[%c0_10, %c0_11, %c0_12, %c0_13] : memref<1x4x2x128xf32, #tpu.memory_space<vmem>>, vector<1x4x2x128xf32>
    %27 = vector.shape_cast %26 : vector<1x4x2x128xf32> to vector<4x2x128xf32>
    %cst_14 = arith.constant dense<0xFF800000> : vector<2x128xf32>
    %28 = vector.multi_reduction <maximumf>, %27, %cst_14 [0] : vector<4x2x128xf32> to vector<2x128xf32>
    %29 = vector.shape_cast %28 : vector<2x128xf32> to vector<1x2x128xf32>
    %30 = vector.broadcast %29 : vector<1x2x128xf32> to vector<4x2x128xf32>
    %31 = arith.subf %27, %30 : vector<4x2x128xf32>
    %32 = math.exp %31 : vector<4x2x128xf32>
    %cst_15 = arith.constant dense<0.000000e+00> : vector<2x128xf32>
    %33 = vector.multi_reduction <add>, %32, %cst_15 [0] : vector<4x2x128xf32> to vector<2x128xf32>
    %cst_16 = arith.constant 0.000000e+00 : f32
    %34 = vector.broadcast %cst_16 : f32 to vector<4x2x128xf32>
    %35 = arith.select %5, %31, %34 : vector<4x2x128xi1>, vector<4x2x128xf32>
    %cst_17 = arith.constant dense<0.000000e+00> : vector<2x128xf32>
    %36 = vector.multi_reduction <add>, %35, %cst_17 [0] : vector<4x2x128xf32> to vector<2x128xf32>
    %37 = math.log %33 : vector<2x128xf32>
    %38 = arith.subf %37, %36 : vector<2x128xf32>
    %39 = arith.addf %25, %38 : vector<2x128xf32>
    %c0_18 = arith.constant 0 : index
    %c0_19 = arith.constant 0 : index
    %c0_20 = arith.constant 0 : index
    %c0_21 = arith.constant 0 : index
    %40 = vector.load %arg5[%c0_18, %c0_19, %c0_20, %c0_21] : memref<1x4x2x128xf32, #tpu.memory_space<vmem>>, vector<1x4x2x128xf32>
    %41 = vector.shape_cast %40 : vector<1x4x2x128xf32> to vector<4x2x128xf32>
    %cst_22 = arith.constant dense<0xFF800000> : vector<2x128xf32>
    %42 = vector.multi_reduction <maximumf>, %41, %cst_22 [0] : vector<4x2x128xf32> to vector<2x128xf32>
    %43 = vector.shape_cast %42 : vector<2x128xf32> to vector<1x2x128xf32>
    %44 = vector.broadcast %43 : vector<1x2x128xf32> to vector<4x2x128xf32>
    %45 = arith.subf %41, %44 : vector<4x2x128xf32>
    %46 = math.exp %45 : vector<4x2x128xf32>
    %cst_23 = arith.constant dense<0.000000e+00> : vector<2x128xf32>
    %47 = vector.multi_reduction <add>, %46, %cst_23 [0] : vector<4x2x128xf32> to vector<2x128xf32>
    %cst_24 = arith.constant 0.000000e+00 : f32
    %48 = vector.broadcast %cst_24 : f32 to vector<4x2x128xf32>
    %49 = arith.select %5, %45, %48 : vector<4x2x128xi1>, vector<4x2x128xf32>
    %cst_25 = arith.constant dense<0.000000e+00> : vector<2x128xf32>
    %50 = vector.multi_reduction <add>, %49, %cst_25 [0] : vector<4x2x128xf32> to vector<2x128xf32>
    %51 = math.log %47 : vector<2x128xf32>
    %52 = arith.subf %51, %50 : vector<2x128xf32>
    %53 = arith.addf %39, %52 : vector<2x128xf32>
    %c0_26 = arith.constant 0 : index
    %c0_27 = arith.constant 0 : index
    %c0_28 = arith.constant 0 : index
    %c0_29 = arith.constant 0 : index
    %54 = vector.load %arg6[%c0_26, %c0_27, %c0_28, %c0_29] : memref<1x4x2x128xf32, #tpu.memory_space<vmem>>, vector<1x4x2x128xf32>
    %55 = vector.shape_cast %54 : vector<1x4x2x128xf32> to vector<4x2x128xf32>
    %cst_30 = arith.constant dense<0xFF800000> : vector<2x128xf32>
    %56 = vector.multi_reduction <maximumf>, %55, %cst_30 [0] : vector<4x2x128xf32> to vector<2x128xf32>
    %57 = vector.shape_cast %56 : vector<2x128xf32> to vector<1x2x128xf32>
    %58 = vector.broadcast %57 : vector<1x2x128xf32> to vector<4x2x128xf32>
    %59 = arith.subf %55, %58 : vector<4x2x128xf32>
    %60 = math.exp %59 : vector<4x2x128xf32>
    %cst_31 = arith.constant dense<0.000000e+00> : vector<2x128xf32>
    %61 = vector.multi_reduction <add>, %60, %cst_31 [0] : vector<4x2x128xf32> to vector<2x128xf32>
    %cst_32 = arith.constant 0.000000e+00 : f32
    %62 = vector.broadcast %cst_32 : f32 to vector<4x2x128xf32>
    %63 = arith.select %5, %59, %62 : vector<4x2x128xi1>, vector<4x2x128xf32>
    %cst_33 = arith.constant dense<0.000000e+00> : vector<2x128xf32>
    %64 = vector.multi_reduction <add>, %63, %cst_33 [0] : vector<4x2x128xf32> to vector<2x128xf32>
    %65 = math.log %61 : vector<2x128xf32>
    %66 = arith.subf %65, %64 : vector<2x128xf32>
    %67 = arith.addf %53, %66 : vector<2x128xf32>
    %c0_34 = arith.constant 0 : index
    %c0_35 = arith.constant 0 : index
    %c0_36 = arith.constant 0 : index
    %c0_37 = arith.constant 0 : index
    %68 = vector.load %arg7[%c0_34, %c0_35, %c0_36, %c0_37] : memref<1x4x2x128xf32, #tpu.memory_space<vmem>>, vector<1x4x2x128xf32>
    %69 = vector.shape_cast %68 : vector<1x4x2x128xf32> to vector<4x2x128xf32>
    %cst_38 = arith.constant dense<0xFF800000> : vector<2x128xf32>
    %70 = vector.multi_reduction <maximumf>, %69, %cst_38 [0] : vector<4x2x128xf32> to vector<2x128xf32>
    %71 = vector.shape_cast %70 : vector<2x128xf32> to vector<1x2x128xf32>
    %72 = vector.broadcast %71 : vector<1x2x128xf32> to vector<4x2x128xf32>
    %73 = arith.subf %69, %72 : vector<4x2x128xf32>
    %74 = math.exp %73 : vector<4x2x128xf32>
    %cst_39 = arith.constant dense<0.000000e+00> : vector<2x128xf32>
    %75 = vector.multi_reduction <add>, %74, %cst_39 [0] : vector<4x2x128xf32> to vector<2x128xf32>
    %cst_40 = arith.constant 0.000000e+00 : f32
    %76 = vector.broadcast %cst_40 : f32 to vector<4x2x128xf32>
    %77 = arith.select %5, %73, %76 : vector<4x2x128xi1>, vector<4x2x128xf32>
    %cst_41 = arith.constant dense<0.000000e+00> : vector<2x128xf32>
    %78 = vector.multi_reduction <add>, %77, %cst_41 [0] : vector<4x2x128xf32> to vector<2x128xf32>
    %79 = math.log %75 : vector<2x128xf32>
    %80 = arith.subf %79, %78 : vector<2x128xf32>
    %81 = arith.addf %67, %80 : vector<2x128xf32>
    %c0_42 = arith.constant 0 : index
    %c0_43 = arith.constant 0 : index
    %c0_44 = arith.constant 0 : index
    %c0_45 = arith.constant 0 : index
    %82 = vector.load %arg8[%c0_42, %c0_43, %c0_44, %c0_45] : memref<1x4x2x128xf32, #tpu.memory_space<vmem>>, vector<1x4x2x128xf32>
    %83 = vector.shape_cast %82 : vector<1x4x2x128xf32> to vector<4x2x128xf32>
    %cst_46 = arith.constant dense<0xFF800000> : vector<2x128xf32>
    %84 = vector.multi_reduction <maximumf>, %83, %cst_46 [0] : vector<4x2x128xf32> to vector<2x128xf32>
    %85 = vector.shape_cast %84 : vector<2x128xf32> to vector<1x2x128xf32>
    %86 = vector.broadcast %85 : vector<1x2x128xf32> to vector<4x2x128xf32>
    %87 = arith.subf %83, %86 : vector<4x2x128xf32>
    %88 = math.exp %87 : vector<4x2x128xf32>
    %cst_47 = arith.constant dense<0.000000e+00> : vector<2x128xf32>
    %89 = vector.multi_reduction <add>, %88, %cst_47 [0] : vector<4x2x128xf32> to vector<2x128xf32>
    %cst_48 = arith.constant 0.000000e+00 : f32
    %90 = vector.broadcast %cst_48 : f32 to vector<4x2x128xf32>
    %91 = arith.select %5, %87, %90 : vector<4x2x128xi1>, vector<4x2x128xf32>
    %cst_49 = arith.constant dense<0.000000e+00> : vector<2x128xf32>
    %92 = vector.multi_reduction <add>, %91, %cst_49 [0] : vector<4x2x128xf32> to vector<2x128xf32>
    %93 = math.log %89 : vector<2x128xf32>
    %94 = arith.subf %93, %92 : vector<2x128xf32>
    %95 = arith.addf %81, %94 : vector<2x128xf32>
    %c0_50 = arith.constant 0 : index
    %c0_51 = arith.constant 0 : index
    %c0_52 = arith.constant 0 : index
    %c0_53 = arith.constant 0 : index
    %96 = vector.load %arg9[%c0_50, %c0_51, %c0_52, %c0_53] : memref<1x4x2x128xf32, #tpu.memory_space<vmem>>, vector<1x4x2x128xf32>
    %97 = vector.shape_cast %96 : vector<1x4x2x128xf32> to vector<4x2x128xf32>
    %cst_54 = arith.constant dense<0xFF800000> : vector<2x128xf32>
    %98 = vector.multi_reduction <maximumf>, %97, %cst_54 [0] : vector<4x2x128xf32> to vector<2x128xf32>
    %99 = vector.shape_cast %98 : vector<2x128xf32> to vector<1x2x128xf32>
    %100 = vector.broadcast %99 : vector<1x2x128xf32> to vector<4x2x128xf32>
    %101 = arith.subf %97, %100 : vector<4x2x128xf32>
    %102 = math.exp %101 : vector<4x2x128xf32>
    %cst_55 = arith.constant dense<0.000000e+00> : vector<2x128xf32>
    %103 = vector.multi_reduction <add>, %102, %cst_55 [0] : vector<4x2x128xf32> to vector<2x128xf32>
    %cst_56 = arith.constant 0.000000e+00 : f32
    %104 = vector.broadcast %cst_56 : f32 to vector<4x2x128xf32>
    %105 = arith.select %5, %101, %104 : vector<4x2x128xi1>, vector<4x2x128xf32>
    %cst_57 = arith.constant dense<0.000000e+00> : vector<2x128xf32>
    %106 = vector.multi_reduction <add>, %105, %cst_57 [0] : vector<4x2x128xf32> to vector<2x128xf32>
    %107 = math.log %103 : vector<2x128xf32>
    %108 = arith.subf %107, %106 : vector<2x128xf32>
    %109 = arith.addf %95, %108 : vector<2x128xf32>
    %cst_58 = arith.constant 0.000000e+00 : f32
    %110 = vector.broadcast %cst_58 : f32 to vector<2x128xf32>
    %111 = arith.select %10, %109, %110 : vector<2x128xi1>, vector<2x128xf32>
    %c0_59 = arith.constant 0 : index
    %c0_60 = arith.constant 0 : index
    %c0_61 = arith.constant 0 : index
    %112 = vector.load %arg10[%c0_59, %c0_60, %c0_61] : memref<1x2x128xf32, #tpu.memory_space<vmem>>, vector<1x2x128xf32>
    %113 = vector.shape_cast %112 : vector<1x2x128xf32> to vector<2x128xf32>
    %114 = vector.shape_cast %111 : vector<2x128xf32> to vector<1x2x128xf32>
    tpu.vector_store %arg10[%c0_59, %c0_60, %c0_61], %114 {strides = array<i32>} : memref<1x2x128xf32, #tpu.memory_space<vmem>>, vector<1x2x128xf32>,
    return
  }
  func.func @transform_0(%arg0: i32, %arg1: i32) -> (i32, i32, i32) {
    %c0_i32 = arith.constant 0 : i32
    %c0_i32_0 = arith.constant 0 : i32
    return %arg0, %arg1, %c0_i32 : i32, i32, i32
  }
  func.func @transform_1(%arg0: i32, %arg1: i32) -> (i32, i32, i32, i32) {
    %c0_i32 = arith.constant 0 : i32
    %c0_i32_0 = arith.constant 0 : i32
    %c0_i32_1 = arith.constant 0 : i32
    return %arg0, %c0_i32, %arg1, %c0_i32_0 : i32, i32, i32, i32
  }
  func.func @transform_2(%arg0: i32, %arg1: i32) -> (i32, i32, i32, i32) {
    %c0_i32 = arith.constant 0 : i32
    %c0_i32_0 = arith.constant 0 : i32
    %c0_i32_1 = arith.constant 0 : i32
    return %arg0, %c0_i32, %arg1, %c0_i32_0 : i32, i32, i32, i32
  }
  func.func @transform_3(%arg0: i32, %arg1: i32) -> (i32, i32, i32, i32) {
    %c0_i32 = arith.constant 0 : i32
    %c0_i32_0 = arith.constant 0 : i32
    %c0_i32_1 = arith.constant 0 : i32
    return %arg0, %c0_i32, %arg1, %c0_i32_0 : i32, i32, i32, i32
  }
  func.func @transform_4(%arg0: i32, %arg1: i32) -> (i32, i32, i32, i32) {
    %c0_i32 = arith.constant 0 : i32
    %c0_i32_0 = arith.constant 0 : i32
    %c0_i32_1 = arith.constant 0 : i32
    return %arg0, %c0_i32, %arg1, %c0_i32_0 : i32, i32, i32, i32
  }
  func.func @transform_5(%arg0: i32, %arg1: i32) -> (i32, i32, i32, i32) {
    %c0_i32 = arith.constant 0 : i32
    %c0_i32_0 = arith.constant 0 : i32
    %c0_i32_1 = arith.constant 0 : i32
    return %arg0, %c0_i32, %arg1, %c0_i32_0 : i32, i32, i32, i32
  }
  func.func @transform_6(%arg0: i32, %arg1: i32) -> (i32, i32, i32, i32) {
    %c0_i32 = arith.constant 0 : i32
    %c0_i32_0 = arith.constant 0 : i32
    %c0_i32_1 = arith.constant 0 : i32
    return %arg0, %c0_i32, %arg1, %c0_i32_0 : i32, i32, i32, i32
  }
  func.func @transform_7(%arg0: i32, %arg1: i32) -> (i32, i32, i32, i32) {
    %c0_i32 = arith.constant 0 : i32
    %c0_i32_0 = arith.constant 0 : i32
    %c0_i32_1 = arith.constant 0 : i32
    return %arg0, %c0_i32, %arg1, %c0_i32_0 : i32, i32, i32, i32
  }
  func.func @transform_8(%arg0: i32, %arg1: i32) -> (i32, i32, i32) {
    %c0_i32 = arith.constant 0 : i32
    %c0_i32_0 = arith.constant 0 : i32
    return %arg0, %arg1, %c0_i32 : i32, i32, i32
  }
}

</mosaic_0001>

<llo_original>
// kernel: tpu_custom_call.1
$region0: #{tpu_custom_call.1}
  #allocation0 [shape = 'u32[]', space=smem, size = 0x4, offset = 0x4, fixed_abs, tag = 'smem constant byte address 0x4 - core index']
  #allocation1 [shape = 'u32[144,128]{1,0:T(1,128)}', space=vmem, size = 0x12000, scoped, tag = 'internal scratch']
  %s0 = inlined_call_operand.hbm [shape: s32[2,2,128], index: 0, kind: input, shape index: {}]
  %s1 = inlined_call_operand.hbm [shape: f32[2,4,2,128], index: 1, kind: input, shape index: {}]
  %s2 = inlined_call_operand.hbm [shape: f32[2,4,2,128], index: 2, kind: input, shape index: {}]
  %s3 = inlined_call_operand.hbm [shape: f32[2,4,2,128], index: 3, kind: input, shape index: {}]
  %s4 = inlined_call_operand.hbm [shape: f32[2,4,2,128], index: 4, kind: input, shape index: {}]
  %s5 = inlined_call_operand.hbm [shape: f32[2,4,2,128], index: 5, kind: input, shape index: {}]
  %s6 = inlined_call_operand.hbm [shape: f32[2,4,2,128], index: 6, kind: input, shape index: {}]
  %s7 = inlined_call_operand.hbm [shape: f32[2,4,2,128], index: 7, kind: input, shape index: {}]
  %s8 = inlined_call_operand.hbm [shape: f32[2,2,128], index: 8, kind: output, shape index: {}]
  %s9 = sld [smem:[#allocation0]]
  $region97: #{tpu_custom_call.1} parent=0
    _
  %s11 = ssub.s32 1, %s9
  %s12 = scalar_select 0, %s11, %s9
  $region1: #{tpu_custom_call.1} parent=0
    #allocation2 [shape = 'u8[2048]{0}', space=vmem, size = 0x800, scoped, tag = 'input window, operand 0']
    #allocation3 [shape = 's32[2]{0}', space=sflag, size = 0x8, scoped, tag = 'scoped memory for tpu_custom_call.1']
    #allocation4 [shape = 's32[2]{0}', space=sflag, size = 0x8, scoped, tag = 'scoped memory for tpu_custom_call.1']
    #allocation5 [shape = 'u8[8192]{0}', space=vmem, size = 0x2000, scoped, tag = 'input window, operand 1']
    #allocation6 [shape = 's32[2]{0}', space=sflag, size = 0x8, scoped, tag = 'scoped memory for tpu_custom_call.1']
    #allocation7 [shape = 'u8[8192]{0}', space=vmem, size = 0x2000, scoped, tag = 'input window, operand 2']
    #allocation8 [shape = 'u8[8192]{0}', space=vmem, size = 0x2000, scoped, tag = 'input window, operand 3']
    #allocation9 [shape = 's32[2]{0}', space=sflag, size = 0x8, scoped, tag = 'scoped memory for tpu_custom_call.1']
    #allocation10 [shape = 'u8[8192]{0}', space=vmem, size = 0x2000, scoped, tag = 'input window, operand 4']
    #allocation11 [shape = 'u8[8192]{0}', space=vmem, size = 0x2000, scoped, tag = 'input window, operand 5']
    #allocation12 [shape = 's32[2]{0}', space=sflag, size = 0x8, scoped, tag = 'scoped memory for tpu_custom_call.1']
    #allocation13 [shape = 'u8[8192]{0}', space=vmem, size = 0x2000, scoped, tag = 'input window, operand 6']
    #allocation14 [shape = 'u8[8192]{0}', space=vmem, size = 0x2000, scoped, tag = 'input window, operand 7']
    #allocation15 [shape = 's32[2]{0}', space=sflag, size = 0x8, scoped, tag = 'scoped memory for tpu_custom_call.1']
    #allocation16 [shape = 'u8[2048]{0}', space=vmem, size = 0x800, scoped, tag = 'output window, operand 0']
    %13 = vsyncpa [#allocation3], 0
    %s14 = scalar_lea.sflag [#allocation3], 1
    %15 = vsyncpa %s14, 0
    %16 = vsyncpa [#allocation6], 0
    %s17 = scalar_lea.sflag [#allocation6], 1
    %18 = vsyncpa %s17, 0
    %19 = vsyncpa [#allocation9], 0
    %s20 = scalar_lea.sflag [#allocation9], 1
    %21 = vsyncpa %s20, 0
    %22 = vsyncpa [#allocation12], 0
    %s23 = scalar_lea.sflag [#allocation12], 1
    %24 = vsyncpa %s23, 0
    %25 = vsyncpa [#allocation15], 0
    %s26 = scalar_lea.sflag [#allocation15], 1
    %27 = vsyncpa %s26, 0
    %28 = vsyncpa [#allocation4], 0
    %s29 = scalar_lea.sflag [#allocation4], 1
    %30 = vsyncpa %s29, 0
    loop: start=0, step=1, limit=4
    $region2: #{tpu_custom_call.1} parent=1 // loop_pre_header
      _
    $region3: #{tpu_custom_call.1} parent=1 // loop_header
      %s32 = sphi 0, %s36
      %p33 = scmp.ge.s32.totalorder %s32, 4
      %s39 = sphi 0, %s51
      %s40 = sphi 0, %s47
      %s41 = sphi 0, %s39
      %s42 = sphi 0, %s40
      %s43 = sphi 0, %s41
      %s44 = sphi 0, %s42
      %s56 = sphi 0, %s58
      %s59 = sphi 0, %s56
      %s60 = sphi 0, %s59
      %s76 = sphi 0, %s60
      %s84 = sphi 0, %s86
      %s87 = sphi 0, %s84
      %s88 = sphi 0, %s87
      %s104 = sphi 0, %s88
      %s112 = sphi 0, %s114
      %s115 = sphi 0, %s112
      %s116 = sphi 0, %s115
      %s132 = sphi 0, %s116
      %s140 = sphi 0, %s142
      %s143 = sphi 0, %s140
      %s144 = sphi 0, %s143
      %s160 = sphi 0, %s144
      %s168 = sphi 0, %s170
      %s171 = sphi 0, %s168
      %s172 = sphi 0, %s171
      %s188 = sphi 0, %s172
      %s196 = sphi 0, %s198
      %s199 = sphi 0, %s196
      %s200 = sphi 0, %s199
      %s216 = sphi 0, %s200
      %s224 = sphi 0, %s226
      %s227 = sphi 0, %s224
      %s228 = sphi 0, %s227
      %s244 = sphi 0, %s228
      %s252 = sphi 0, %s254
      %s255 = sphi 0, %s252
      %s256 = sphi 0, %s255
      %s272 = sphi 0, %s256
      %s280 = sphi 0, %s282
      %s283 = sphi 0, %s280
      %s284 = sphi 0, %s283
      %s300 = sphi 0, %s284
    $region4: #{tpu_custom_call.1} parent=1 // loop_header_branch
      %35 = sbr.rel (%p33) target = $region8
    $region5: #{tpu_custom_call.1} parent=1 // loop_body
      %s37 = ssub.s32 %s32, 1
      %s38 = ssub.s32 %s32, 2
      %s45 = sadd.s32 1, %s40
      %p46 = scmp.ge.s32.totalorder %s45, 1
      %s47 = scalar_select %p46, 0, %s45
      %s48 = sadd.s32 1, %s39
      %s49 = scalar_select %p46, %s48, %s39
      %p50 = scmp.ge.s32.totalorder %s49, 2
      %s51 = scalar_select %p50, 0, %s49
      %s52 = ssub.s32 %s39, %s51
      %s53 = ssub.s32 %s40, %s47
      %s54 = sor.u32 %s52, %s53
      %p55 = scmp.eq.s32.totalorder %s54, 0
      %s57 = sadd.s32 %s56, 1
      %s58 = scalar_select %p55, %s56, %s57
      %p61 = pneg %p55
      %p62 = scmp.eq.s32.totalorder %s32, 1
      %p63 = por %p61, %p62
      %p64 = scmp.ne.s32.totalorder %s56, %s59
      %p65 = scmp.eq.s32.totalorder %s32, 0
      %p66 = por %p64, %p65
      %p67 = scmp.ne.s32.totalorder %s56, %s59
      %p68 = scmp.eq.s32.totalorder %s37, 1
      %p69 = por %p67, %p68
      %p70 = scmp.ne.s32.totalorder %s59, %s60
      %p71 = scmp.eq.s32.totalorder %s37, 0
      %p72 = por %p70, %p71
      %p73 = scmp.ne.s32.totalorder %s59, %s60
      %p74 = scmp.eq.s32.totalorder %s38, 1
      %p75 = por %p73, %p74
      %p77 = scmp.ne.s32.totalorder %s60, %s76
      %p78 = scmp.eq.s32.totalorder %s38, 0
      %p79 = por %p77, %p78
      %s80 = ssub.s32 %s39, %s51
      %s81 = ssub.s32 %s40, %s47
      %s82 = sor.u32 %s80, %s81
      %p83 = scmp.eq.s32.totalorder %s82, 0
      %s85 = sadd.s32 %s84, 1
      %s86 = scalar_select %p83, %s84, %s85
      %p89 = pneg %p83
      %p90 = scmp.eq.s32.totalorder %s32, 1
      %p91 = por %p89, %p90
      %p92 = scmp.ne.s32.totalorder %s84, %s87
      %p93 = scmp.eq.s32.totalorder %s32, 0
      %p94 = por %p92, %p93
      %p95 = scmp.ne.s32.totalorder %s84, %s87
      %p96 = scmp.eq.s32.totalorder %s37, 1
      %p97 = por %p95, %p96
      %p98 = scmp.ne.s32.totalorder %s87, %s88
      %p99 = scmp.eq.s32.totalorder %s37, 0
      %p100 = por %p98, %p99
      %p101 = scmp.ne.s32.totalorder %s87, %s88
      %p102 = scmp.eq.s32.totalorder %s38, 1
      %p103 = por %p101, %p102
      %p105 = scmp.ne.s32.totalorder %s88, %s104
      %p106 = scmp.eq.s32.totalorder %s38, 0
      %p107 = por %p105, %p106
      %s108 = ssub.s32 %s39, %s51
      %s109 = ssub.s32 %s40, %s47
      %s110 = sor.u32 %s108, %s109
      %p111 = scmp.eq.s32.totalorder %s110, 0
      %s113 = sadd.s32 %s112, 1
      %s114 = scalar_select %p111, %s112, %s113
      %p117 = pneg %p111
      %p118 = scmp.eq.s32.totalorder %s32, 1
      %p119 = por %p117, %p118
      %p120 = scmp.ne.s32.totalorder %s112, %s115
      %p121 = scmp.eq.s32.totalorder %s32, 0
      %p122 = por %p120, %p121
      %p123 = scmp.ne.s32.totalorder %s112, %s115
      %p124 = scmp.eq.s32.totalorder %s37, 1
      %p125 = por %p123, %p124
      %p126 = scmp.ne.s32.totalorder %s115, %s116
      %p127 = scmp.eq.s32.totalorder %s37, 0
      %p128 = por %p126, %p127
      %p129 = scmp.ne.s32.totalorder %s115, %s116
      %p130 = scmp.eq.s32.totalorder %s38, 1
      %p131 = por %p129, %p130
      %p133 = scmp.ne.s32.totalorder %s116, %s132
      %p134 = scmp.eq.s32.totalorder %s38, 0
      %p135 = por %p133, %p134
      %s136 = ssub.s32 %s39, %s51
      %s137 = ssub.s32 %s40, %s47
      %s138 = sor.u32 %s136, %s137
      %p139 = scmp.eq.s32.totalorder %s138, 0
      %s141 = sadd.s32 %s140, 1
      %s142 = scalar_select %p139, %s140, %s141
      %p145 = pneg %p139
      %p146 = scmp.eq.s32.totalorder %s32, 1
      %p147 = por %p145, %p146
      %p148 = scmp.ne.s32.totalorder %s140, %s143
      %p149 = scmp.eq.s32.totalorder %s32, 0
      %p150 = por %p148, %p149
      %p151 = scmp.ne.s32.totalorder %s140, %s143
      %p152 = scmp.eq.s32.totalorder %s37, 1
      %p153 = por %p151, %p152
      %p154 = scmp.ne.s32.totalorder %s143, %s144
      %p155 = scmp.eq.s32.totalorder %s37, 0
      %p156 = por %p154, %p155
      %p157 = scmp.ne.s32.totalorder %s143, %s144
      %p158 = scmp.eq.s32.totalorder %s38, 1
      %p159 = por %p157, %p158
      %p161 = scmp.ne.s32.totalorder %s144, %s160
      %p162 = scmp.eq.s32.totalorder %s38, 0
      %p163 = por %p161, %p162
      %s164 = ssub.s32 %s39, %s51
      %s165 = ssub.s32 %s40, %s47
      %s166 = sor.u32 %s164, %s165
      %p167 = scmp.eq.s32.totalorder %s166, 0
      %s169 = sadd.s32 %s168, 1
      %s170 = scalar_select %p167, %s168, %s169
      %p173 = pneg %p167
      %p174 = scmp.eq.s32.totalorder %s32, 1
      %p175 = por %p173, %p174
      %p176 = scmp.ne.s32.totalorder %s168, %s171
      %p177 = scmp.eq.s32.totalorder %s32, 0
      %p178 = por %p176, %p177
      %p179 = scmp.ne.s32.totalorder %s168, %s171
      %p180 = scmp.eq.s32.totalorder %s37, 1
      %p181 = por %p179, %p180
      %p182 = scmp.ne.s32.totalorder %s171, %s172
      %p183 = scmp.eq.s32.totalorder %s37, 0
      %p184 = por %p182, %p183
      %p185 = scmp.ne.s32.totalorder %s171, %s172
      %p186 = scmp.eq.s32.totalorder %s38, 1
      %p187 = por %p185, %p186
      %p189 = scmp.ne.s32.totalorder %s172, %s188
      %p190 = scmp.eq.s32.totalorder %s38, 0
      %p191 = por %p189, %p190
      %s192 = ssub.s32 %s39, %s51
      %s193 = ssub.s32 %s40, %s47
      %s194 = sor.u32 %s192, %s193
      %p195 = scmp.eq.s32.totalorder %s194, 0
      %s197 = sadd.s32 %s196, 1
      %s198 = scalar_select %p195, %s196, %s197
      %p201 = pneg %p195
      %p202 = scmp.eq.s32.totalorder %s32, 1
      %p203 = por %p201, %p202
      %p204 = scmp.ne.s32.totalorder %s196, %s199
      %p205 = scmp.eq.s32.totalorder %s32, 0
      %p206 = por %p204, %p205
      %p207 = scmp.ne.s32.totalorder %s196, %s199
      %p208 = scmp.eq.s32.totalorder %s37, 1
      %p209 = por %p207, %p208
      %p210 = scmp.ne.s32.totalorder %s199, %s200
      %p211 = scmp.eq.s32.totalorder %s37, 0
      %p212 = por %p210, %p211
      %p213 = scmp.ne.s32.totalorder %s199, %s200
      %p214 = scmp.eq.s32.totalorder %s38, 1
      %p215 = por %p213, %p214
      %p217 = scmp.ne.s32.totalorder %s200, %s216
      %p218 = scmp.eq.s32.totalorder %s38, 0
      %p219 = por %p217, %p218
      %s220 = ssub.s32 %s39, %s51
      %s221 = ssub.s32 %s40, %s47
      %s222 = sor.u32 %s220, %s221
      %p223 = scmp.eq.s32.totalorder %s222, 0
      %s225 = sadd.s32 %s224, 1
      %s226 = scalar_select %p223, %s224, %s225
      %p229 = pneg %p223
      %p230 = scmp.eq.s32.totalorder %s32, 1
      %p231 = por %p229, %p230
      %p232 = scmp.ne.s32.totalorder %s224, %s227
      %p233 = scmp.eq.s32.totalorder %s32, 0
      %p234 = por %p232, %p233
      %p235 = scmp.ne.s32.totalorder %s224, %s227
      %p236 = scmp.eq.s32.totalorder %s37, 1
      %p237 = por %p235, %p236
      %p238 = scmp.ne.s32.totalorder %s227, %s228
      %p239 = scmp.eq.s32.totalorder %s37, 0
      %p240 = por %p238, %p239
      %p241 = scmp.ne.s32.totalorder %s227, %s228
      %p242 = scmp.eq.s32.totalorder %s38, 1
      %p243 = por %p241, %p242
      %p245 = scmp.ne.s32.totalorder %s228, %s244
      %p246 = scmp.eq.s32.totalorder %s38, 0
      %p247 = por %p245, %p246
      %s248 = ssub.s32 %s39, %s51
      %s249 = ssub.s32 %s40, %s47
      %s250 = sor.u32 %s248, %s249
      %p251 = scmp.eq.s32.totalorder %s250, 0
      %s253 = sadd.s32 %s252, 1
      %s254 = scalar_select %p251, %s252, %s253
      %p257 = pneg %p251
      %p258 = scmp.eq.s32.totalorder %s32, 1
      %p259 = por %p257, %p258
      %p260 = scmp.ne.s32.totalorder %s252, %s255
      %p261 = scmp.eq.s32.totalorder %s32, 0
      %p262 = por %p260, %p261
      %p263 = scmp.ne.s32.totalorder %s252, %s255
      %p264 = scmp.eq.s32.totalorder %s37, 1
      %p265 = por %p263, %p264
      %p266 = scmp.ne.s32.totalorder %s255, %s256
      %p267 = scmp.eq.s32.totalorder %s37, 0
      %p268 = por %p266, %p267
      %p269 = scmp.ne.s32.totalorder %s255, %s256
      %p270 = scmp.eq.s32.totalorder %s38, 1
      %p271 = por %p269, %p270
      %p273 = scmp.ne.s32.totalorder %s256, %s272
      %p274 = scmp.eq.s32.totalorder %s38, 0
      %p275 = por %p273, %p274
      %s276 = ssub.s32 %s39, %s51
      %s277 = ssub.s32 %s40, %s47
      %s278 = sor.u32 %s276, %s277
      %p279 = scmp.eq.s32.totalorder %s278, 0
      %s281 = sadd.s32 %s280, 1
      %s282 = scalar_select %p279, %s280, %s281
      %p285 = pneg %p279
      %p286 = scmp.eq.s32.totalorder %s32, 1
      %p287 = por %p285, %p286
      %p288 = scmp.ne.s32.totalorder %s280, %s283
      %p289 = scmp.eq.s32.totalorder %s32, 0
      %p290 = por %p288, %p289
      %p291 = scmp.ne.s32.totalorder %s280, %s283
      %p292 = scmp.eq.s32.totalorder %s37, 1
      %p293 = por %p291, %p292
      %p294 = scmp.ne.s32.totalorder %s283, %s284
      %p295 = scmp.eq.s32.totalorder %s37, 0
      %p296 = por %p294, %p295
      %p297 = scmp.ne.s32.totalorder %s283, %s284
      %p298 = scmp.eq.s32.totalorder %s38, 1
      %p299 = por %p297, %p298
      %p301 = scmp.ne.s32.totalorder %s284, %s300
      %p302 = scmp.eq.s32.totalorder %s38, 0
      %p303 = por %p301, %p302
      %p304 = scmp.le.s32.totalorder 1, %s32
      %p305 = scmp.lt.s32.totalorder %s32, 3
      %p306 = pnand %p304, %p305
      %p307 = pneg %p306
      // Predicated region
      $region9: #{tpu_custom_call.1} parent=5 // pred_check
        _
      $region10: #{tpu_custom_call.1} parent=5 // pred_check_branch
        %309 = sbr.rel (%p306) target = $region12
      $region11: #{tpu_custom_call.1} parent=5 // pred_region
        %s310 = ssub.s32 %s32, 1
      $region12: #{tpu_custom_call.1} parent=5 // pred_fallthru
        _
      %p311 = scmp.lt.s32.totalorder %s32, 2
      // Predicated region
      $region13: #{tpu_custom_call.1} parent=5 // pred_check
        %p312 = pneg %p311
      $region14: #{tpu_custom_call.1} parent=5 // pred_check_branch
        %314 = sbr.rel (%p312) target = $region16
      $region15: #{tpu_custom_call.1} parent=5 // pred_region
        // Predicated region
        $region17: #{tpu_custom_call.1} parent=15 // pred_check
          %p315 = pneg %p66
        $region18: #{tpu_custom_call.1} parent=15 // pred_check_branch
          %317 = sbr.rel (%p315) target = $region20
        $region19: #{tpu_custom_call.1} parent=15 // pred_region
          %s318 = sand.u32 %s56, 1
          %s319 = scalar_lea.sflag [#allocation3], %s318
          %s320 = sand.u32 %s56, 1
          %s321 = smul.addr %s320, 2
          %s322 = scalar_lea.vmem [#allocation2], %s321
          %s324 = ssub.s32 32, 32
          %325 = vsyncadd %s319, %s324
          %s326 = sadd.s32 %s40, %s39
          %s327 = smul.addr %s326, 32
          %s328 = scalar_lea.hbm %s0, %s327
          %s330 = sshll.u32 %s322, 4
          %s331 = int_to_ptr.vmem [resolvable:$true] %s330
          %333 = dma.hbm_to_vmem [thread:$0]  %s328, 32, %s331, %s319
        $region20: #{tpu_custom_call.1} parent=15 // pred_fallthru
          _
        // Predicated region
        $region21: #{tpu_custom_call.1} parent=15 // pred_check
          %p334 = pneg %p94
        $region22: #{tpu_custom_call.1} parent=15 // pred_check_branch
          %336 = sbr.rel (%p334) target = $region24
        $region23: #{tpu_custom_call.1} parent=15 // pred_region
          %s337 = sand.u32 %s32, 1
          %s338 = scalar_lea.sflag [#allocation6], %s337
          %s339 = sand.u32 %s84, 1
          %s340 = smul.addr %s339, 8
          %s341 = scalar_lea.vmem [#allocation5], %s340
          %s343 = ssub.s32 128, 128
          %344 = vsyncadd %s338, %s343
          %s345 = smul.addr %s39, 4
          %s346 = sadd.s32 %s40, %s345
          %s347 = smul.addr %s346, 32
          %s348 = scalar_lea.hbm %s1, %s347
          %s349 = sshll.u32 %s341, 4
          %s350 = int_to_ptr.vmem [resolvable:$true] %s349
          %355 = dma.hbm_to_vmem [thread:$0]  %s348, 128, %s350, %s338, 32, 32, 2
        $region24: #{tpu_custom_call.1} parent=15 // pred_fallthru
          _
        // Predicated region
        $region25: #{tpu_custom_call.1} parent=15 // pred_check
          %p356 = pneg %p122
        $region26: #{tpu_custom_call.1} parent=15 // pred_check_branch
          %358 = sbr.rel (%p356) target = $region28
        $region27: #{tpu_custom_call.1} parent=15 // pred_region
          %s359 = sand.u32 %s32, 1
          %s360 = scalar_lea.sflag [#allocation6], %s359
          %s361 = sand.u32 %s112, 1
          %s362 = smul.addr %s361, 8
          %s363 = scalar_lea.vmem [#allocation7], %s362
          %s365 = ssub.s32 128, 128
          %366 = vsyncadd %s360, %s365
          %s367 = smul.addr %s39, 4
          %s368 = sadd.s32 %s40, %s367
          %s369 = smul.addr %s368, 32
          %s370 = scalar_lea.hbm %s2, %s369
          %s371 = sshll.u32 %s363, 4
          %s372 = int_to_ptr.vmem [resolvable:$true] %s371
          %377 = dma.hbm_to_vmem [thread:$0]  %s370, 128, %s372, %s360, 32, 32, 2
        $region28: #{tpu_custom_call.1} parent=15 // pred_fallthru
          _
        // Predicated region
        $region29: #{tpu_custom_call.1} parent=15 // pred_check
          %p378 = pneg %p150
        $region30: #{tpu_custom_call.1} parent=15 // pred_check_branch
          %380 = sbr.rel (%p378) target = $region32
        $region31: #{tpu_custom_call.1} parent=15 // pred_region
          %s381 = sand.u32 %s32, 1
          %s382 = scalar_lea.sflag [#allocation9], %s381
          %s383 = sand.u32 %s140, 1
          %s384 = smul.addr %s383, 8
          %s385 = scalar_lea.vmem [#allocation8], %s384
          %s387 = ssub.s32 128, 128
          %388 = vsyncadd %s382, %s387
          %s389 = smul.addr %s39, 4
          %s390 = sadd.s32 %s40, %s389
          %s391 = smul.addr %s390, 32
          %s392 = scalar_lea.hbm %s3, %s391
          %s393 = sshll.u32 %s385, 4
          %s394 = int_to_ptr.vmem [resolvable:$true] %s393
          %399 = dma.hbm_to_vmem [thread:$0]  %s392, 128, %s394, %s382, 32, 32, 2
        $region32: #{tpu_custom_call.1} parent=15 // pred_fallthru
          _
        // Predicated region
        $region33: #{tpu_custom_call.1} parent=15 // pred_check
          %p400 = pneg %p178
        $region34: #{tpu_custom_call.1} parent=15 // pred_check_branch
          %402 = sbr.rel (%p400) target = $region36
        $region35: #{tpu_custom_call.1} parent=15 // pred_region
          %s403 = sand.u32 %s32, 1
          %s404 = scalar_lea.sflag [#allocation9], %s403
          %s405 = sand.u32 %s168, 1
          %s406 = smul.addr %s405, 8
          %s407 = scalar_lea.vmem [#allocation10], %s406
          %s409 = ssub.s32 128, 128
          %410 = vsyncadd %s404, %s409
          %s411 = smul.addr %s39, 4
          %s412 = sadd.s32 %s40, %s411
          %s413 = smul.addr %s412, 32
          %s414 = scalar_lea.hbm %s4, %s413
          %s415 = sshll.u32 %s407, 4
          %s416 = int_to_ptr.vmem [resolvable:$true] %s415
          %421 = dma.hbm_to_vmem [thread:$0]  %s414, 128, %s416, %s404, 32, 32, 2
        $region36: #{tpu_custom_call.1} parent=15 // pred_fallthru
          _
        // Predicated region
        $region37: #{tpu_custom_call.1} parent=15 // pred_check
          %p422 = pneg %p206
        $region38: #{tpu_custom_call.1} parent=15 // pred_check_branch
          %424 = sbr.rel (%p422) target = $region40
        $region39: #{tpu_custom_call.1} parent=15 // pred_region
          %s425 = sand.u32 %s32, 1
          %s426 = scalar_lea.sflag [#allocation12], %s425
          %s427 = sand.u32 %s196, 1
          %s428 = smul.addr %s427, 8
          %s429 = scalar_lea.vmem [#allocation11], %s428
          %s431 = ssub.s32 128, 128
          %432 = vsyncadd %s426, %s431
          %s433 = smul.addr %s39, 4
          %s434 = sadd.s32 %s40, %s433
          %s435 = smul.addr %s434, 32
          %s436 = scalar_lea.hbm %s5, %s435
          %s437 = sshll.u32 %s429, 4
          %s438 = int_to_ptr.vmem [resolvable:$true] %s437
          %443 = dma.hbm_to_vmem [thread:$0]  %s436, 128, %s438, %s426, 32, 32, 2
        $region40: #{tpu_custom_call.1} parent=15 // pred_fallthru
          _
        // Predicated region
        $region41: #{tpu_custom_call.1} parent=15 // pred_check
          %p444 = pneg %p234
        $region42: #{tpu_custom_call.1} parent=15 // pred_check_branch
          %446 = sbr.rel (%p444) target = $region44
        $region43: #{tpu_custom_call.1} parent=15 // pred_region
          %s447 = sand.u32 %s32, 1
          %s448 = scalar_lea.sflag [#allocation12], %s447
          %s449 = sand.u32 %s224, 1
          %s450 = smul.addr %s449, 8
          %s451 = scalar_lea.vmem [#allocation13], %s450
          %s453 = ssub.s32 128, 128
          %454 = vsyncadd %s448, %s453
          %s455 = smul.addr %s39, 4
          %s456 = sadd.s32 %s40, %s455
          %s457 = smul.addr %s456, 32
          %s458 = scalar_lea.hbm %s6, %s457
          %s459 = sshll.u32 %s451, 4
          %s460 = int_to_ptr.vmem [resolvable:$true] %s459
          %465 = dma.hbm_to_vmem [thread:$0]  %s458, 128, %s460, %s448, 32, 32, 2
        $region44: #{tpu_custom_call.1} parent=15 // pred_fallthru
          _
        // Predicated region
        $region45: #{tpu_custom_call.1} parent=15 // pred_check
          %p466 = pneg %p262
        $region46: #{tpu_custom_call.1} parent=15 // pred_check_branch
          %468 = sbr.rel (%p466) target = $region48
        $region47: #{tpu_custom_call.1} parent=15 // pred_region
          %s469 = sand.u32 %s252, 1
          %s470 = scalar_lea.sflag [#allocation15], %s469
          %s471 = sand.u32 %s252, 1
          %s472 = smul.addr %s471, 8
          %s473 = scalar_lea.vmem [#allocation14], %s472
          %s475 = ssub.s32 128, 128
          %476 = vsyncadd %s470, %s475
          %s477 = smul.addr %s39, 4
          %s478 = sadd.s32 %s40, %s477
          %s479 = smul.addr %s478, 32
          %s480 = scalar_lea.hbm %s7, %s479
          %s481 = sshll.u32 %s473, 4
          %s482 = int_to_ptr.vmem [resolvable:$true] %s481
          %487 = dma.hbm_to_vmem [thread:$0]  %s480, 128, %s482, %s470, 32, 32, 2
        $region48: #{tpu_custom_call.1} parent=15 // pred_fallthru
          _
      $region16: #{tpu_custom_call.1} parent=5 // pred_fallthru
        _
      %p488 = scmp.le.s32.totalorder 1, %s32
      %p489 = scmp.lt.s32.totalorder %s32, 3
      %p490 = pnand %p488, %p489
      %p491 = pneg %p490
      // Predicated region
      $region49: #{tpu_custom_call.1} parent=5 // pred_check
        _
      $region50: #{tpu_custom_call.1} parent=5 // pred_check_branch
        %493 = sbr.rel (%p490) target = $region52
      $region51: #{tpu_custom_call.1} parent=5 // pred_region
        %s494 = ssub.s32 %s32, 1
        %s495 = sand.u32 %s59, 1
        %s496 = scalar_lea.sflag [#allocation3], %s495
        %s497 = sand.u32 %s59, 1
        %s498 = smul.addr %s497, 2
        %s499 = scalar_lea.vmem [#allocation2], %s498
        // Predicated region
        $region53: #{tpu_custom_call.1} parent=51 // pred_check
          %p500 = pneg %p72
        $region54: #{tpu_custom_call.1} parent=51 // pred_check_branch
          %502 = sbr.rel (%p500) target = $region56
        $region55: #{tpu_custom_call.1} parent=51 // pred_region
          %503 = dma.done %s496, 32
        $region56: #{tpu_custom_call.1} parent=51 // pred_fallthru
          _
        %s504 = sand.u32 %s37, 1
        %s505 = scalar_lea.sflag [#allocation6], %s504
        %s506 = sand.u32 %s87, 1
        %s507 = smul.addr %s506, 8
        %s508 = scalar_lea.vmem [#allocation5], %s507
        // Predicated region
        $region57: #{tpu_custom_call.1} parent=51 // pred_check
          %p509 = pneg %p100
        $region58: #{tpu_custom_call.1} parent=51 // pred_check_branch
          %511 = sbr.rel (%p509) target = $region60
        $region59: #{tpu_custom_call.1} parent=51 // pred_region
          %512 = dma.done %s505, 128
        $region60: #{tpu_custom_call.1} parent=51 // pred_fallthru
          _
        %s513 = sand.u32 %s37, 1
        %s514 = scalar_lea.sflag [#allocation6], %s513
        %s515 = sand.u32 %s115, 1
        %s516 = smul.addr %s515, 8
        %s517 = scalar_lea.vmem [#allocation7], %s516
        // Predicated region
        $region61: #{tpu_custom_call.1} parent=51 // pred_check
          %p518 = pneg %p128
        $region62: #{tpu_custom_call.1} parent=51 // pred_check_branch
          %520 = sbr.rel (%p518) target = $region64
        $region63: #{tpu_custom_call.1} parent=51 // pred_region
          %521 = dma.done %s514, 128
        $region64: #{tpu_custom_call.1} parent=51 // pred_fallthru
          _
        %s522 = sand.u32 %s37, 1
        %s523 = scalar_lea.sflag [#allocation9], %s522
        %s524 = sand.u32 %s143, 1
        %s525 = smul.addr %s524, 8
        %s526 = scalar_lea.vmem [#allocation8], %s525
        // Predicated region
        $region65: #{tpu_custom_call.1} parent=51 // pred_check
          %p527 = pneg %p156
        $region66: #{tpu_custom_call.1} parent=51 // pred_check_branch
          %529 = sbr.rel (%p527) target = $region68
        $region67: #{tpu_custom_call.1} parent=51 // pred_region
          %530 = dma.done %s523, 128
        $region68: #{tpu_custom_call.1} parent=51 // pred_fallthru
          _
        %s531 = sand.u32 %s37, 1
        %s532 = scalar_lea.sflag [#allocation9], %s531
        %s533 = sand.u32 %s171, 1
        %s534 = smul.addr %s533, 8
        %s535 = scalar_lea.vmem [#allocation10], %s534
        // Predicated region
        $region69: #{tpu_custom_call.1} parent=51 // pred_check
          %p536 = pneg %p184
        $region70: #{tpu_custom_call.1} parent=51 // pred_check_branch
          %538 = sbr.rel (%p536) target = $region72
        $region71: #{tpu_custom_call.1} parent=51 // pred_region
          %539 = dma.done %s532, 128
        $region72: #{tpu_custom_call.1} parent=51 // pred_fallthru
          _
        %s540 = sand.u32 %s37, 1
        %s541 = scalar_lea.sflag [#allocation12], %s540
        %s542 = sand.u32 %s199, 1
        %s543 = smul.addr %s542, 8
        %s544 = scalar_lea.vmem [#allocation11], %s543
        // Predicated region
        $region73: #{tpu_custom_call.1} parent=51 // pred_check
          %p545 = pneg %p212
        $region74: #{tpu_custom_call.1} parent=51 // pred_check_branch
          %547 = sbr.rel (%p545) target = $region76
        $region75: #{tpu_custom_call.1} parent=51 // pred_region
          %548 = dma.done %s541, 128
        $region76: #{tpu_custom_call.1} parent=51 // pred_fallthru
          _
        %s549 = sand.u32 %s37, 1
        %s550 = scalar_lea.sflag [#allocation12], %s549
        %s551 = sand.u32 %s227, 1
        %s552 = smul.addr %s551, 8
        %s553 = scalar_lea.vmem [#allocation13], %s552
        // Predicated region
        $region77: #{tpu_custom_call.1} parent=51 // pred_check
          %p554 = pneg %p240
        $region78: #{tpu_custom_call.1} parent=51 // pred_check_branch
          %556 = sbr.rel (%p554) target = $region80
        $region79: #{tpu_custom_call.1} parent=51 // pred_region
          %557 = dma.done %s550, 128
        $region80: #{tpu_custom_call.1} parent=51 // pred_fallthru
          _
        %s558 = sand.u32 %s255, 1
        %s559 = scalar_lea.sflag [#allocation15], %s558
        %s560 = sand.u32 %s255, 1
        %s561 = smul.addr %s560, 8
        %s562 = scalar_lea.vmem [#allocation14], %s561
        // Predicated region
        $region81: #{tpu_custom_call.1} parent=51 // pred_check
          %p563 = pneg %p268
        $region82: #{tpu_custom_call.1} parent=51 // pred_check_branch
          %565 = sbr.rel (%p563) target = $region84
        $region83: #{tpu_custom_call.1} parent=51 // pred_region
          %566 = dma.done %s559, 128
        $region84: #{tpu_custom_call.1} parent=51 // pred_fallthru
          _
        %s567 = sand.u32 %s59, 1
        %s568 = scalar_lea.sflag [#allocation3], %s567
        %s569 = sand.u32 %s59, 1
        %s570 = smul.addr %s569, 2
        %s571 = scalar_lea.vmem [#allocation2], %s570
        %p572 = pneg %p72
        %p573 = pneg %p69
        %s574 = sand.u32 %s37, 1
        %s575 = scalar_lea.sflag [#allocation6], %s574
        %s576 = sand.u32 %s87, 1
        %s577 = smul.addr %s576, 8
        %s578 = scalar_lea.vmem [#allocation5], %s577
        %p579 = pneg %p100
        %p580 = pneg %p97
        %s581 = sand.u32 %s37, 1
        %s582 = scalar_lea.sflag [#allocation6], %s581
        %s583 = sand.u32 %s115, 1
        %s584 = smul.addr %s583, 8
        %s585 = scalar_lea.vmem [#allocation7], %s584
        %p586 = pneg %p128
        %p587 = pneg %p125
        %s588 = sand.u32 %s37, 1
        %s589 = scalar_lea.sflag [#allocation9], %s588
        %s590 = sand.u32 %s143, 1
        %s591 = smul.addr %s590, 8
        %s592 = scalar_lea.vmem [#allocation8], %s591
        %p593 = pneg %p156
        %p594 = pneg %p153
        %s595 = sand.u32 %s37, 1
        %s596 = scalar_lea.sflag [#allocation9], %s595
        %s597 = sand.u32 %s171, 1
        %s598 = smul.addr %s597, 8
        %s599 = scalar_lea.vmem [#allocation10], %s598
        %p600 = pneg %p184
        %p601 = pneg %p181
        %s602 = sand.u32 %s37, 1
        %s603 = scalar_lea.sflag [#allocation12], %s602
        %s604 = sand.u32 %s199, 1
        %s605 = smul.addr %s604, 8
        %s606 = scalar_lea.vmem [#allocation11], %s605
        %p607 = pneg %p212
        %p608 = pneg %p209
        %s609 = sand.u32 %s37, 1
        %s610 = scalar_lea.sflag [#allocation12], %s609
        %s611 = sand.u32 %s227, 1
        %s612 = smul.addr %s611, 8
        %s613 = scalar_lea.vmem [#allocation13], %s612
        %p614 = pneg %p240
        %p615 = pneg %p237
        %s616 = sand.u32 %s255, 1
        %s617 = scalar_lea.sflag [#allocation15], %s616
        %s618 = sand.u32 %s255, 1
        %s619 = smul.addr %s618, 8
        %s620 = scalar_lea.vmem [#allocation14], %s619
        %p621 = pneg %p268
        %p622 = pneg %p265
        %p623 = pneg %p296
        %p624 = pneg %p293
        %s625 = sand.u32 %s283, 1
        %s626 = scalar_lea.sflag [#allocation4], %s625
        %s627 = sand.u32 %s283, 1
        %s628 = smul.addr %s627, 2
        %s629 = scalar_lea.vmem [#allocation16], %s628
        %v630 = vld [vmem:[%s499] sm:$0x3]
        %vm631 = vcmp.eq.s32.totalorder %v630, 0
        %vm632 = vcmp.eq.s32.totalorder %v630, 1
        %vm633 = vcmp.eq.s32.totalorder %v630, 2
        %vm634 = vcmp.eq.s32.totalorder %v630, 3
        %vm635 = vcmp.ge.s32.totalorder %v630, 0
        %vm636 = vcmp.lt.s32.totalorder %v630, 4
        %vm637 = vmand %vm635, %vm636
        %v638 = vld [vmem:[%s508] sm:$0x3]
        %v639 = vld [vmem:[%s508 + $0x2] sm:$0x3]
        %v640 = vld [vmem:[%s508 + $0x4] sm:$0x3]
        %v641 = vld [vmem:[%s508 + $0x6] sm:$0x3]
        %vm642 = vcmask 1041408
        %v643 = vsel %vm642, %v638, -inf
        %v644 = vsel %vm642, %v639, -inf
        %v645 = vsel %vm642, %v640, -inf
        %v646 = vsel %vm642, %v641, -inf
        %v647 = vmax.f32 %v643, %v644
        %v648 = vmax.f32 %v645, %v646
        %v649 = vmax.f32 %v647, %v648
        %v650 = vsub.f32 %v638, %v649
        %v651 = vsub.f32 %v639, %v649
        %v652 = vsub.f32 %v640, %v649
        %v653 = vsub.f32 %v641, %v649
        %v654 = vmul.f32 %v650, 1.442695
        %v655 = vpow.pop %v654
        %v656 = vmul.f32 %v651, 1.442695
        %v657 = vpow.pop %v656
        %v658 = vmul.f32 %v652, 1.442695
        %v659 = vpow.pop %v658
        %v660 = vmul.f32 %v653, 1.442695
        %v661 = vpow.pop %v660
        %v662 = vsel %vm642, %v655, 0.0
        %v663 = vsel %vm642, %v657, 0.0
        %v664 = vadd.f32 %v662, %v663
        %v665 = vsel %vm642, %v659, 0.0
        %v666 = vadd.f32 %v664, %v665
        %v667 = vsel %vm642, %v661, 0.0
        %v668 = vadd.f32 %v666, %v667
        %v669 = vsel %vm631, %v650, 0.0
        %v670 = vsel %vm632, %v651, 0.0
        %v671 = vsel %vm633, %v652, 0.0
        %v672 = vsel %vm634, %v653, 0.0
        %v673 = vsel %vm642, %v669, 0.0
        %v674 = vsel %vm642, %v670, 0.0
        %v675 = vadd.f32 %v673, %v674
        %v676 = vsel %vm642, %v671, 0.0
        %v677 = vadd.f32 %v675, %v676
        %v678 = vsel %vm642, %v672, 0.0
        %v679 = vadd.f32 %v677, %v678
        %v680 = vlog2.pop %v668
        %v681 = vmul.f32 %v680, 0.6931472
        %v682 = vsub.f32 %v681, %v679
        %v683 = vadd.f32 %v682, 0.0
        %v684 = vld [vmem:[%s517] sm:$0x3]
        %v685 = vld [vmem:[%s517 + $0x2] sm:$0x3]
        %v686 = vld [vmem:[%s517 + $0x4] sm:$0x3]
        %v687 = vld [vmem:[%s517 + $0x6] sm:$0x3]
        %v688 = vsel %vm642, %v684, -inf
        %v689 = vsel %vm642, %v685, -inf
        %v690 = vsel %vm642, %v686, -inf
        %v691 = vsel %vm642, %v687, -inf
        %v692 = vmax.f32 %v688, %v689
        %v693 = vmax.f32 %v690, %v691
        %v694 = vmax.f32 %v692, %v693
        %v695 = vsub.f32 %v684, %v694
        %v696 = vsub.f32 %v685, %v694
        %v697 = vsub.f32 %v686, %v694
        %v698 = vsub.f32 %v687, %v694
        %v699 = vmul.f32 %v695, 1.442695
        %v700 = vpow.pop %v699
        %v701 = vmul.f32 %v696, 1.442695
        %v702 = vpow.pop %v701
        %v703 = vmul.f32 %v697, 1.442695
        %v704 = vpow.pop %v703
        %v705 = vmul.f32 %v698, 1.442695
        %v706 = vpow.pop %v705
        %v707 = vsel %vm642, %v700, 0.0
        %v708 = vsel %vm642, %v702, 0.0
        %v709 = vadd.f32 %v707, %v708
        %v710 = vsel %vm642, %v704, 0.0
        %v711 = vadd.f32 %v709, %v710
        %v712 = vsel %vm642, %v706, 0.0
        %v713 = vadd.f32 %v711, %v712
        %v714 = vsel %vm631, %v695, 0.0
        %v715 = vsel %vm632, %v696, 0.0
        %v716 = vsel %vm633, %v697, 0.0
        %v717 = vsel %vm634, %v698, 0.0
        %v718 = vsel %vm642, %v714, 0.0
        %v719 = vsel %vm642, %v715, 0.0
        %v720 = vadd.f32 %v718, %v719
        %v721 = vsel %vm642, %v716, 0.0
        %v722 = vadd.f32 %v720, %v721
        %v723 = vsel %vm642, %v717, 0.0
        %v724 = vadd.f32 %v722, %v723
        %v725 = vlog2.pop %v713
        %v726 = vmul.f32 %v725, 0.6931472
        %v727 = vsub.f32 %v726, %v724
        %v728 = vadd.f32 %v683, %v727
        %v729 = vld [vmem:[%s526] sm:$0x3]
        %v730 = vld [vmem:[%s526 + $0x2] sm:$0x3]
        %v731 = vld [vmem:[%s526 + $0x4] sm:$0x3]
        %v732 = vld [vmem:[%s526 + $0x6] sm:$0x3]
        %v733 = vsel %vm642, %v729, -inf
        %v734 = vsel %vm642, %v730, -inf
        %v735 = vsel %vm642, %v731, -inf
        %v736 = vsel %vm642, %v732, -inf
        %v737 = vmax.f32 %v733, %v734
        %v738 = vmax.f32 %v735, %v736
        %v739 = vmax.f32 %v737, %v738
        %v740 = vsub.f32 %v729, %v739
        %v741 = vsub.f32 %v730, %v739
        %v742 = vsub.f32 %v731, %v739
        %v743 = vsub.f32 %v732, %v739
        %v744 = vmul.f32 %v740, 1.442695
        %v745 = vpow.pop %v744
        %v746 = vmul.f32 %v741, 1.442695
        %v747 = vpow.pop %v746
        %v748 = vmul.f32 %v742, 1.442695
        %v749 = vpow.pop %v748
        %v750 = vmul.f32 %v743, 1.442695
        %v751 = vpow.pop %v750
        %v752 = vsel %vm642, %v745, 0.0
        %v753 = vsel %vm642, %v747, 0.0
        %v754 = vadd.f32 %v752, %v753
        %v755 = vsel %vm642, %v749, 0.0
        %v756 = vadd.f32 %v754, %v755
        %v757 = vsel %vm642, %v751, 0.0
        %v758 = vadd.f32 %v756, %v757
        %v759 = vsel %vm631, %v740, 0.0
        %v760 = vsel %vm632, %v741, 0.0
        %v761 = vsel %vm633, %v742, 0.0
        %v762 = vsel %vm634, %v743, 0.0
        %v763 = vsel %vm642, %v759, 0.0
        %v764 = vsel %vm642, %v760, 0.0
        %v765 = vadd.f32 %v763, %v764
        %v766 = vsel %vm642, %v761, 0.0
        %v767 = vadd.f32 %v765, %v766
        %v768 = vsel %vm642, %v762, 0.0
        %v769 = vadd.f32 %v767, %v768
        %v770 = vlog2.pop %v758
        %v771 = vmul.f32 %v770, 0.6931472
        %v772 = vsub.f32 %v771, %v769
        %v773 = vadd.f32 %v728, %v772
        %v774 = vld [vmem:[%s535] sm:$0x3]
        %v775 = vld [vmem:[%s535 + $0x2] sm:$0x3]
        %v776 = vld [vmem:[%s535 + $0x4] sm:$0x3]
        %v777 = vld [vmem:[%s535 + $0x6] sm:$0x3]
        %v778 = vsel %vm642, %v774, -inf
        %v779 = vsel %vm642, %v775, -inf
        %v780 = vsel %vm642, %v776, -inf
        %v781 = vsel %vm642, %v777, -inf
        %v782 = vmax.f32 %v778, %v779
        %v783 = vmax.f32 %v780, %v781
        %v784 = vmax.f32 %v782, %v783
        %v785 = vsub.f32 %v774, %v784
        %v786 = vsub.f32 %v775, %v784
        %v787 = vsub.f32 %v776, %v784
        %v788 = vsub.f32 %v777, %v784
        %v789 = vmul.f32 %v785, 1.442695
        %v790 = vpow.pop %v789
        %v791 = vmul.f32 %v786, 1.442695
        %v792 = vpow.pop %v791
        %v793 = vmul.f32 %v787, 1.442695
        %v794 = vpow.pop %v793
        %v795 = vmul.f32 %v788, 1.442695
        %v796 = vpow.pop %v795
        %v797 = vsel %vm642, %v790, 0.0
        %v798 = vsel %vm642, %v792, 0.0
        %v799 = vadd.f32 %v797, %v798
        %v800 = vsel %vm642, %v794, 0.0
        %v801 = vadd.f32 %v799, %v800
        %v802 = vsel %vm642, %v796, 0.0
        %v803 = vadd.f32 %v801, %v802
        %v804 = vsel %vm631, %v785, 0.0
        %v805 = vsel %vm632, %v786, 0.0
        %v806 = vsel %vm633, %v787, 0.0
        %v807 = vsel %vm634, %v788, 0.0
        %v808 = vsel %vm642, %v804, 0.0
        %v809 = vsel %vm642, %v805, 0.0
        %v810 = vadd.f32 %v808, %v809
        %v811 = vsel %vm642, %v806, 0.0
        %v812 = vadd.f32 %v810, %v811
        %v813 = vsel %vm642, %v807, 0.0
        %v814 = vadd.f32 %v812, %v813
        %v815 = vlog2.pop %v803
        %v816 = vmul.f32 %v815, 0.6931472
        %v817 = vsub.f32 %v816, %v814
        %v818 = vadd.f32 %v773, %v817
        %v819 = vld [vmem:[%s544] sm:$0x3]
        %v820 = vld [vmem:[%s544 + $0x2] sm:$0x3]
        %v821 = vld [vmem:[%s544 + $0x4] sm:$0x3]
        %v822 = vld [vmem:[%s544 + $0x6] sm:$0x3]
        %v823 = vsel %vm642, %v819, -inf
        %v824 = vsel %vm642, %v820, -inf
        %v825 = vsel %vm642, %v821, -inf
        %v826 = vsel %vm642, %v822, -inf
        %v827 = vmax.f32 %v823, %v824
        %v828 = vmax.f32 %v825, %v826
        %v829 = vmax.f32 %v827, %v828
        %v830 = vsub.f32 %v819, %v829
        %v831 = vsub.f32 %v820, %v829
        %v832 = vsub.f32 %v821, %v829
        %v833 = vsub.f32 %v822, %v829
        %v834 = vmul.f32 %v830, 1.442695
        %v835 = vpow.pop %v834
        %v836 = vmul.f32 %v831, 1.442695
        %v837 = vpow.pop %v836
        %v838 = vmul.f32 %v832, 1.442695
        %v839 = vpow.pop %v838
        %v840 = vmul.f32 %v833, 1.442695
        %v841 = vpow.pop %v840
        %v842 = vsel %vm642, %v835, 0.0
        %v843 = vsel %vm642, %v837, 0.0
        %v844 = vadd.f32 %v842, %v843
        %v845 = vsel %vm642, %v839, 0.0
        %v846 = vadd.f32 %v844, %v845
        %v847 = vsel %vm642, %v841, 0.0
        %v848 = vadd.f32 %v846, %v847
        %v849 = vsel %vm631, %v830, 0.0
        %v850 = vsel %vm632, %v831, 0.0
        %v851 = vsel %vm633, %v832, 0.0
        %v852 = vsel %vm634, %v833, 0.0
        %v853 = vsel %vm642, %v849, 0.0
        %v854 = vsel %vm642, %v850, 0.0
        %v855 = vadd.f32 %v853, %v854
        %v856 = vsel %vm642, %v851, 0.0
        %v857 = vadd.f32 %v855, %v856
        %v858 = vsel %vm642, %v852, 0.0
        %v859 = vadd.f32 %v857, %v858
        %v860 = vlog2.pop %v848
        %v861 = vmul.f32 %v860, 0.6931472
        %v862 = vsub.f32 %v861, %v859
        %v863 = vadd.f32 %v818, %v862
        %v864 = vld [vmem:[%s553] sm:$0x3]
        %v865 = vld [vmem:[%s553 + $0x2] sm:$0x3]
        %v866 = vld [vmem:[%s553 + $0x4] sm:$0x3]
        %v867 = vld [vmem:[%s553 + $0x6] sm:$0x3]
        %v868 = vsel %vm642, %v864, -inf
        %v869 = vsel %vm642, %v865, -inf
        %v870 = vsel %vm642, %v866, -inf
        %v871 = vsel %vm642, %v867, -inf
        %v872 = vmax.f32 %v868, %v869
        %v873 = vmax.f32 %v870, %v871
        %v874 = vmax.f32 %v872, %v873
        %v875 = vsub.f32 %v864, %v874
        %v876 = vsub.f32 %v865, %v874
        %v877 = vsub.f32 %v866, %v874
        %v878 = vsub.f32 %v867, %v874
        %v879 = vmul.f32 %v875, 1.442695
        %v880 = vpow.pop %v879
        %v881 = vmul.f32 %v876, 1.442695
        %v882 = vpow.pop %v881
        %v883 = vmul.f32 %v877, 1.442695
        %v884 = vpow.pop %v883
        %v885 = vmul.f32 %v878, 1.442695
        %v886 = vpow.pop %v885
        %v887 = vsel %vm642, %v880, 0.0
        %v888 = vsel %vm642, %v882, 0.0
        %v889 = vadd.f32 %v887, %v888
        %v890 = vsel %vm642, %v884, 0.0
        %v891 = vadd.f32 %v889, %v890
        %v892 = vsel %vm642, %v886, 0.0
        %v893 = vadd.f32 %v891, %v892
        %v894 = vsel %vm631, %v875, 0.0
        %v895 = vsel %vm632, %v876, 0.0
        %v896 = vsel %vm633, %v877, 0.0
        %v897 = vsel %vm634, %v878, 0.0
        %v898 = vsel %vm642, %v894, 0.0
        %v899 = vsel %vm642, %v895, 0.0
        %v900 = vadd.f32 %v898, %v899
        %v901 = vsel %vm642, %v896, 0.0
        %v902 = vadd.f32 %v900, %v901
        %v903 = vsel %vm642, %v897, 0.0
        %v904 = vadd.f32 %v902, %v903
        %v905 = vlog2.pop %v893
        %v906 = vmul.f32 %v905, 0.6931472
        %v907 = vsub.f32 %v906, %v904
        %v908 = vadd.f32 %v863, %v907
        %v909 = vld [vmem:[%s562] sm:$0x3]
        %v910 = vld [vmem:[%s562 + $0x2] sm:$0x3]
        %v911 = vld [vmem:[%s562 + $0x4] sm:$0x3]
        %v912 = vld [vmem:[%s562 + $0x6] sm:$0x3]
        %v913 = vsel %vm642, %v909, -inf
        %v914 = vsel %vm642, %v910, -inf
        %v915 = vsel %vm642, %v911, -inf
        %v916 = vsel %vm642, %v912, -inf
        %v917 = vmax.f32 %v913, %v914
        %v918 = vmax.f32 %v915, %v916
        %v919 = vmax.f32 %v917, %v918
        %v920 = vsub.f32 %v909, %v919
        %v921 = vsub.f32 %v910, %v919
        %v922 = vsub.f32 %v911, %v919
        %v923 = vsub.f32 %v912, %v919
        %v924 = vmul.f32 %v920, 1.442695
        %v925 = vpow.pop %v924
        %v926 = vmul.f32 %v921, 1.442695
        %v927 = vpow.pop %v926
        %v928 = vmul.f32 %v922, 1.442695
        %v929 = vpow.pop %v928
        %v930 = vmul.f32 %v923, 1.442695
        %v931 = vpow.pop %v930
        %v932 = vsel %vm642, %v925, 0.0
        %v933 = vsel %vm642, %v927, 0.0
        %v934 = vadd.f32 %v932, %v933
        %v935 = vsel %vm642, %v929, 0.0
        %v936 = vadd.f32 %v934, %v935
        %v937 = vsel %vm642, %v931, 0.0
        %v938 = vadd.f32 %v936, %v937
        %v939 = vsel %vm631, %v920, 0.0
        %v940 = vsel %vm632, %v921, 0.0
        %v941 = vsel %vm633, %v922, 0.0
        %v942 = vsel %vm634, %v923, 0.0
        %v943 = vsel %vm642, %v939, 0.0
        %v944 = vsel %vm642, %v940, 0.0
        %v945 = vadd.f32 %v943, %v944
        %v946 = vsel %vm642, %v941, 0.0
        %v947 = vadd.f32 %v945, %v946
        %v948 = vsel %vm642, %v942, 0.0
        %v949 = vadd.f32 %v947, %v948
        %v950 = vlog2.pop %v938
        %v951 = vmul.f32 %v950, 0.6931472
        %v952 = vsub.f32 %v951, %v949
        %v953 = vadd.f32 %v908, %v952
        %v954 = vsel %vm637, %v953, 0.0
        %955 = vst [vmem:[%s629] sm:$0x3] %v954
        %s956 = sand.u32 %s283, 1
        %s957 = scalar_lea.sflag [#allocation4], %s956
        %s958 = sand.u32 %s283, 1
        %s959 = smul.addr %s958, 2
        %s960 = scalar_lea.vmem [#allocation16], %s959
        // Predicated region
        $region85: #{tpu_custom_call.1} parent=51 // pred_check
          %p961 = pneg %p293
        $region86: #{tpu_custom_call.1} parent=51 // pred_check_branch
          %963 = sbr.rel (%p961) target = $region88
        $region87: #{tpu_custom_call.1} parent=51 // pred_region
          %s965 = ssub.s32 32, 32
          %966 = vsyncadd %s957, %s965
          %s967 = sadd.s32 %s42, %s41
          %s968 = smul.addr %s967, 32
          %s969 = scalar_lea.hbm %s8, %s968
          %s971 = sshll.u32 %s960, 4
          %s972 = int_to_ptr.vmem [resolvable:$true] %s971
          %974 = dma.vmem_to_hbm [thread:$0]  %s972, 32, %s969, %s957
        $region88: #{tpu_custom_call.1} parent=51 // pred_fallthru
          _
      $region52: #{tpu_custom_call.1} parent=5 // pred_fallthru
        _
      %p975 = scmp.le.s32.totalorder 2, %s32
      // Predicated region
      $region89: #{tpu_custom_call.1} parent=5 // pred_check
        %p976 = pneg %p975
      $region90: #{tpu_custom_call.1} parent=5 // pred_check_branch
        %978 = sbr.rel (%p976) target = $region92
      $region91: #{tpu_custom_call.1} parent=5 // pred_region
        %s979 = ssub.s32 %s32, 2
        // Predicated region
        $region93: #{tpu_custom_call.1} parent=91 // pred_check
          %p980 = pneg %p299
        $region94: #{tpu_custom_call.1} parent=91 // pred_check_branch
          %982 = sbr.rel (%p980) target = $region96
        $region95: #{tpu_custom_call.1} parent=91 // pred_region
          %s983 = sand.u32 %s284, 1
          %s984 = scalar_lea.sflag [#allocation4], %s983
          %s985 = sand.u32 %s284, 1
          %s986 = smul.addr %s985, 2
          %s987 = scalar_lea.vmem [#allocation16], %s986
          %988 = dma.done %s984, 32
        $region96: #{tpu_custom_call.1} parent=91 // pred_fallthru
          _
      $region92: #{tpu_custom_call.1} parent=5 // pred_fallthru
        _
    $region6: #{tpu_custom_call.1} parent=1 // loop_footer
      %s36 = sadd.s32 1, %s32
    $region7: #{tpu_custom_call.1} parent=1 // loop_footer_branch
      %31 = sbr.rel target = $region3
    $region8: #{tpu_custom_call.1} parent=1 // loop_exit
      _
    %989 = vsyncpa [#allocation3], 1
    %s990 = scalar_lea.sflag [#allocation3], 1
    %991 = vsyncpa %s990, 1
    %992 = vsyncpa [#allocation6], 1
    %s993 = scalar_lea.sflag [#allocation6], 1
    %994 = vsyncpa %s993, 1
    %995 = vsyncpa [#allocation9], 1
    %s996 = scalar_lea.sflag [#allocation9], 1
    %997 = vsyncpa %s996, 1
    %998 = vsyncpa [#allocation12], 1
    %s999 = scalar_lea.sflag [#allocation12], 1
    %1000 = vsyncpa %s999, 1
    %1001 = vsyncpa [#allocation15], 1
    %s1002 = scalar_lea.sflag [#allocation15], 1
    %1003 = vsyncpa %s1002, 1
    %1004 = vsyncpa [#allocation4], 1
    %s1005 = scalar_lea.sflag [#allocation4], 1
    %1006 = vsyncpa %s1005, 1

</llo_original>
